<compile_context>
chip_gen: v7x
topology: tpu7x:2x2x1
jax: 0.10.0
libtpu: 0.0.40
codegen_flags: <defaults>
</compile_context>

<pallas_src>
import jax
import jax.numpy as jnp
from jax import lax
from jax.experimental import pallas as pl
from jax.experimental.pallas import tpu as pltpu

# Small, TPU-friendly sizes (lane-dense feature/output dims).
N = 16    # rows in each source array
D = 64    # features per source array  (L * D = 128 -> lane-dense concat dim)
L = 2     # number of arrays in the list `x`
M = 16    # number of gather indices
H = 128   # child Linear output features (multiple of 128 -> unmasked stores)


def index_merger_kernel(idx_ref, x_ref, w_ref, b_ref, out_ref):
    """One-hot MXU gather of rows by `indices`, then the child Linear."""
    # idx_ref: (M, 1) int32, already wrapped/clamped in the wrapper.
    idx = idx_ref[...]                                              # (M, 1)
    onehot = (lax.broadcasted_iota(jnp.int32, (M, N), 1) == idx)    # (M, N) bool
    onehot = onehot.astype(jnp.float32)

    # Gather hot path: exact row gather via one-hot matmul (HIGHEST precision so
    # source rows are reproduced bit-faithfully, not bf16-truncated in the MXU).
    g = jnp.dot(onehot, x_ref[...],
                preferred_element_type=jnp.float32,
                precision=lax.Precision.HIGHEST)                    # (M, 2*D)

    # Child module: Linear on the (packed) gathered rows.
    # TODO(synk): childModule is arbitrary in the torch spec; a Linear stands in.
    out = jnp.dot(g, w_ref[...],
                  preferred_element_type=jnp.float32,
                  precision=lax.Precision.HIGHEST)                  # (M, H)
    out_ref[...] = (out + b_ref[...]).astype(out_ref.dtype)


def index_merger(x_list, indices, w, b):
    """x_list: list of L=2 arrays of shape [N, D]; indices: [M] int."""
    # Pack the list along the feature axis in the wrapper -> one 128-lane operand.
    x_cat = jnp.concatenate(x_list, axis=-1)           # (N, L*D) = (16, 128)
    b2 = b.reshape(1, H)

    # PyTorch indexing parity: negative indices wrap; then clamp for safety
    # (Pallas does no bounds checking on VMEM refs).
    idx = indices.astype(jnp.int32)
    idx = jnp.where(idx < 0, idx + N, idx)
    idx = jnp.clip(idx, 0, N - 1).reshape(M, 1)

    return pl.pallas_call(
        index_merger_kernel,
        out_shape=jax.ShapeDtypeStruct((M, H), jnp.float32),
        in_specs=[
            pl.BlockSpec(memory_space=pltpu.MemorySpace.VMEM),  # indices (M, 1)
            pl.BlockSpec(memory_space=pltpu.MemorySpace.VMEM),  # packed x (N, L*D)
            pl.BlockSpec(memory_space=pltpu.MemorySpace.VMEM),  # weight (L*D, H)
            pl.BlockSpec(memory_space=pltpu.MemorySpace.VMEM),  # bias (1, H)
        ],
        out_specs=pl.BlockSpec(memory_space=pltpu.MemorySpace.VMEM),
    )(idx, x_cat, w, b2)


if __name__ == "__main__":
    key = jax.random.PRNGKey(0)
    k0, k1, k2, k3, k4 = jax.random.split(key, 5)

    # Inputs (stand-ins for the numpy arrays the torch module would receive).
    x0 = jax.random.normal(k0, (N, D), dtype=jnp.float32)
    x1 = jax.random.normal(k1, (N, D), dtype=jnp.float32)
    indices = jax.random.randint(k2, (M,), 0, N, dtype=jnp.int32)

    # Deterministic child-module (Linear) parameters.
    w = jax.random.normal(k3, (L * D, H), dtype=jnp.float32) * 0.05
    b = jax.random.normal(k4, (H,), dtype=jnp.float32) * 0.05

    out = index_merger([x0, x1], indices, w, b)
    out = jax.block_until_ready(out)

    # Pure-JAX reference of the same semantics (matching full-precision matmul).
    gathered = jnp.concatenate([x0[indices], x1[indices]], axis=-1)
    ref = jnp.dot(gathered, w, precision=lax.Precision.HIGHEST) + b
    assert out.shape == (M, H)
    assert jnp.allclose(out, ref, rtol=1e-5, atol=1e-5)

    print("KERNEL_OK")
</pallas_src>

<mosaic_0001>
module attributes {stable_mosaic.version = 11 : i64} {
  func.func @index_merger_kernel(%arg0: memref<16x1xi32, #tpu.memory_space<vmem>>, %arg1: memref<16x128xf32, #tpu.memory_space<vmem>>, %arg2: memref<128x128xf32, #tpu.memory_space<vmem>>, %arg3: memref<1x128xf32, #tpu.memory_space<vmem>>, %arg4: memref<16x128xf32, #tpu.memory_space<vmem>>) attributes {dimension_semantics = [], scalar_prefetch = 0 : i64, scratch_operands = 0 : i64, tpu.core_type = #tpu.core_type<tc>} {
    %c0 = arith.constant 0 : index
    %c0_0 = arith.constant 0 : index
    %0 = vector.load %arg0[%c0, %c0_0] : memref<16x1xi32, #tpu.memory_space<vmem>>, vector<16x1xi32>
    %1 = tpu.iota {dimensions = array<i32: 1>} : vector<16x16xi32>
    %2 = vector.broadcast %0 : vector<16x1xi32> to vector<16x16xi32>
    %3 = arith.cmpi eq, %1, %2 : vector<16x16xi32>
    %4 = arith.extui %3 : vector<16x16xi1> to vector<16x16xi32>
    %5 = arith.sitofp %4 : vector<16x16xi32> to vector<16x16xf32>
    %c0_1 = arith.constant 0 : index
    %c0_2 = arith.constant 0 : index
    %6 = vector.load %arg1[%c0_1, %c0_2] : memref<16x128xf32, #tpu.memory_space<vmem>>, vector<16x128xf32>
    %cst = arith.constant dense<0.000000e+00> : vector<16x128xf32>
    %7 = tpu.matmul %5, %6, %cst {dimension_numbers = #tpu.dot_dimension_numbers<[1], [0], [0], [1], [0, 0, 1, 1], [], []>, precision = #tpu.contract_precision<fp32>} : vector<16x16xf32>, vector<16x128xf32>, vector<16x128xf32> -> vector<16x128xf32>
    %c0_3 = arith.constant 0 : index
    %c0_4 = arith.constant 0 : index
    %8 = vector.load %arg2[%c0_3, %c0_4] : memref<128x128xf32, #tpu.memory_space<vmem>>, vector<128x128xf32>
    %cst_5 = arith.constant dense<0.000000e+00> : vector<16x128xf32>
    %9 = tpu.matmul %7, %8, %cst_5 {dimension_numbers = #tpu.dot_dimension_numbers<[1], [0], [0], [1], [0, 0, 1, 1], [], []>, precision = #tpu.contract_precision<fp32>} : vector<16x128xf32>, vector<128x128xf32>, vector<16x128xf32> -> vector<16x128xf32>
    %c0_6 = arith.constant 0 : index
    %c0_7 = arith.constant 0 : index
    %10 = vector.load %arg3[%c0_6, %c0_7] : memref<1x128xf32, #tpu.memory_space<vmem>>, vector<1x128xf32>
    %11 = vector.broadcast %10 : vector<1x128xf32> to vector<16x128xf32>
    %12 = arith.addf %9, %11 : vector<16x128xf32>
    %c0_8 = arith.constant 0 : index
    %c0_9 = arith.constant 0 : index
    %13 = vector.load %arg4[%c0_8, %c0_9] : memref<16x128xf32, #tpu.memory_space<vmem>>, vector<16x128xf32>
    tpu.vector_store %arg4[%c0_8, %c0_9], %12 {strides = array<i32>} : memref<16x128xf32, #tpu.memory_space<vmem>>, vector<16x128xf32>,
    return
  }
}

</mosaic_0001>

<llo_original>
// kernel: tpu_custom_call.1
$region0: #{tpu_custom_call.1}
  #allocation0 [shape = 'u32[]', space=smem, size = 0x4, offset = 0x4, fixed_abs, tag = 'smem constant byte address 0x4 - core index']
  #allocation1 [shape = 'u32[144,128]{1,0:T(1,128)}', space=vmem, size = 0x12000, scoped, tag = 'internal scratch']
  %s0 = inlined_call_operand.vmem [shape: s32[16,1], index: 0, kind: input, shape index: {}]
  %s1 = inlined_call_operand.vmem [shape: f32[16,128], index: 1, kind: input, shape index: {}]
  %s2 = inlined_call_operand.hbm [shape: f32[128,128], index: 2, kind: input, shape index: {}]
  %s3 = inlined_call_operand.vmem [shape: f32[1,128], index: 3, kind: input, shape index: {}]
  %s4 = inlined_call_operand.hbm [shape: f32[16,128], index: 4, kind: output, shape index: {}]
  %s5 = sld [smem:[#allocation0]]
  $region30: #{tpu_custom_call.1} parent=0
    _
  %s7 = ssub.s32 1, %s5
  %s8 = scalar_select 0, %s7, %s5
  $region1: #{tpu_custom_call.1} parent=0
    #allocation2 [shape = 'u8[65536]{0}', space=vmem, size = 0x10000, scoped, tag = 'input window, operand 2, single buffered']
    #allocation3 [shape = 's32[1]{0}', space=sflag, size = 0x4, scoped, tag = 'scoped memory for tpu_custom_call.1']
    #allocation4 [shape = 's32[1]{0}', space=sflag, size = 0x4, scoped, tag = 'scoped memory for tpu_custom_call.1']
    #allocation5 [shape = 'u8[8192]{0}', space=vmem, size = 0x2000, scoped, tag = 'output window, operand 0, single buffered']
    %9 = vsyncpa [#allocation3], 0
    %10 = vsyncpa [#allocation4], 0
    // Predicated region
    $region2: #{tpu_custom_call.1} parent=1 // pred_check
      _
    $region3: #{tpu_custom_call.1} parent=1 // pred_check_branch
      %12 = sbr.rel (0) target = $region5
    $region4: #{tpu_custom_call.1} parent=1 // pred_region
      _
    $region5: #{tpu_custom_call.1} parent=1 // pred_fallthru
      _
    // Predicated region
    $region6: #{tpu_custom_call.1} parent=1 // pred_check
      _
    $region7: #{tpu_custom_call.1} parent=1 // pred_check_branch
      %14 = sbr.rel (0) target = $region9
    $region8: #{tpu_custom_call.1} parent=1 // pred_region
      _
    $region9: #{tpu_custom_call.1} parent=1 // pred_fallthru
      _
    // Predicated region
    $region10: #{tpu_custom_call.1} parent=1 // pred_check
      _
    $region11: #{tpu_custom_call.1} parent=1 // pred_check_branch
      %16 = sbr.rel (0) target = $region13
    $region12: #{tpu_custom_call.1} parent=1 // pred_region
      %s18 = ssub.s32 2048, 2048
      %19 = vsyncadd [#allocation3], %s18
      %s20 = sshll.u32 [#allocation2], 4
      %s21 = int_to_ptr.vmem [resolvable:$true] %s20
      %26 = dma.hbm_to_vmem [thread:$0]  %s2, 2048, %s21, [#allocation3], 128, 128, 8
    $region13: #{tpu_custom_call.1} parent=1 // pred_fallthru
      _
    // Predicated region
    $region14: #{tpu_custom_call.1} parent=1 // pred_check
      _
    $region15: #{tpu_custom_call.1} parent=1 // pred_check_branch
      %28 = sbr.rel (0) target = $region17
    $region16: #{tpu_custom_call.1} parent=1 // pred_region
      _
    $region17: #{tpu_custom_call.1} parent=1 // pred_fallthru
      _
    // Predicated region
    $region18: #{tpu_custom_call.1} parent=1 // pred_check
      _
    $region19: #{tpu_custom_call.1} parent=1 // pred_check_branch
      %30 = sbr.rel (0) target = $region21
    $region20: #{tpu_custom_call.1} parent=1 // pred_region
      %31 = dma.done [#allocation3], 2048
    $region21: #{tpu_custom_call.1} parent=1 // pred_fallthru
      _
    %v32 = vld [vmem:[%s0] sm:$0xff]
    %v33 = vld [vmem:[%s0 + $0x8] sm:$0xff]
    %v34 = vlaneseq
    %v35 = vand.u32 %v34, 127
    %36 = vset.pattern.permute.xlu0 0
    %37 = vperm.xlu0 %36, %v32
    %v38 = vpop.permute.xlu0 %37
    %39 = vset.pattern.permute.xlu0 0
    %40 = vperm.xlu0 %39, %v33
    %v41 = vpop.permute.xlu0 %40
    %vm42 = vcmp.eq.s32.totalorder %v35, %v38
    %vm43 = vcmp.eq.s32.totalorder %v35, %v41
    %v44 = vsel %vm42, 1, 0
    %v45 = vsel %vm43, 1, 0
    %v46 = vcvt.s32.f32 %v44
    %v47 = vcvt.s32.f32 %v45
    %v48 = vld [vmem:[%s1] sm:$0xff]
    %v49 = vld [vmem:[%s1 + $0x8] sm:$0xff]
    %vm50 = vcmask 130048
    %v52 = vsel %vm50, %v46, 0
    %v55 = vsel %vm50, %v47, 0
    %57 = vmatprep.subr.mxu0 0.0
    %v58 = vand.u32 %v48, 4294901760
    %59 = vmatpush1.msra.mxu0 %v58
    %60 = vmatprep.subr.mxu0 0.0
    %v61 = vand.u32 %v49, 4294901760
    %62 = vmatpush1.msra.mxu0 %v61
    %63 = vmatprep.subr.mxu0 0.0
    %64 = vmatpush1.msra.mxu0 0.0
    %65 = vmatprep.subr.mxu0 0.0
    %66 = vmatpush1.msra.mxu0 0.0
    %67 = vmatprep.subr.mxu0 0.0
    %68 = vmatpush1.msra.mxu0 0.0
    %69 = vmatprep.subr.mxu0 0.0
    %70 = vmatpush1.msra.mxu0 0.0
    %71 = vmatprep.subr.mxu0 0.0
    %72 = vmatpush1.msra.mxu0 0.0
    %73 = vmatprep.subr.mxu0 0.0
    %74 = vmatpush1.msra.mxu0 0.0
    %75 = vmatprep.subr.mxu0 0.0
    %76 = vmatpush1.msra.mxu0 0.0
    %77 = vmatprep.subr.mxu0 0.0
    %78 = vmatpush1.msra.mxu0 0.0
    %79 = vmatprep.subr.mxu0 0.0
    %80 = vmatpush1.msra.mxu0 0.0
    %81 = vmatprep.subr.mxu0 0.0
    %82 = vmatpush1.msra.mxu0 0.0
    %83 = vmatprep.subr.mxu0 0.0
    %84 = vmatpush1.msra.mxu0 0.0
    %85 = vmatprep.subr.mxu0 0.0
    %86 = vmatpush1.msra.mxu0 0.0
    %87 = vmatprep.subr.mxu0 0.0
    %88 = vmatpush1.msra.mxu0 0.0
    %89 = vmatprep.subr.mxu0 0.0
    %90 = vmatpush1.msra.mxu0 0.0
    %91 = vmatprep.subr.mxu0 0.0
    %92 = vmatpush1.msra.mxu0 0.0
    %93 = vmatprep.subr.mxu0 0.0
    %94 = vmatpush1.msra.mxu0 0.0
    %95 = vmatprep.subr.mxu0 0.0
    %96 = vmatpush1.msra.mxu0 0.0
    %97 = vmatprep.subr.mxu0 0.0
    %98 = vmatpush1.msra.mxu0 0.0
    %99 = vmatprep.subr.mxu0 0.0
    %100 = vmatpush1.msra.mxu0 0.0
    %101 = vmatprep.subr.mxu0 0.0
    %102 = vmatpush1.msra.mxu0 0.0
    %103 = vmatprep.subr.mxu0 0.0
    %104 = vmatpush1.msra.mxu0 0.0
    %105 = vmatprep.subr.mxu0 0.0
    %106 = vmatpush1.msra.mxu0 0.0
    %107 = vmatprep.subr.mxu0 0.0
    %108 = vmatpush1.msra.mxu0 0.0
    %109 = vmatprep.subr.mxu0 0.0
    %110 = vmatpush1.msra.mxu0 0.0
    %111 = vmatprep.subr.mxu0 0.0
    %112 = vmatpush1.msra.mxu0 0.0
    %113 = vmatprep.subr.mxu0 0.0
    %114 = vmatpush1.msra.mxu0 0.0
    %115 = vmatprep.subr.mxu0 0.0
    %116 = vmatpush1.msra.mxu0 0.0
    %117 = vmatprep.subr.mxu0 0.0
    %118 = vmatpush1.msra.mxu0 0.0
    %119 = vmatprep.subr.mxu0 0.0
    %120 = vmatpush1.msra.mxu0 0.0
    %121 = vmatprep.subr.mxu0 0.0
    %122 = vmatpush1.msra.mxu0 0.0
    %123 = vmatprep.mubr.f32.mxu0 0.0
    %v124 = vand.u32 %v52, 4294901760
    %v125 = vsub.f32 %v52, %v124
    %v126 = vand.u32 %v125, 4294901760
    %v127 = vsub.f32 %v125, %v126
    %v128 = vand.u32 %v127, 4294901760
    %129 = vmatmul.mubr.f32.gmra.mrb[0].mxu0 %v128
    %v130 = vpop.f32.mrb[0].mxu0
    %v131 = vadd.f32 0.0, %v130
    %v132 = vpop.f32.mrb[0].mxu0
    %133 = vmatprep.mubr.f32.mxu0 0.0
    %v134 = vand.u32 %v55, 4294901760
    %v135 = vsub.f32 %v55, %v134
    %v136 = vand.u32 %v135, 4294901760
    %v137 = vsub.f32 %v135, %v136
    %v138 = vand.u32 %v137, 4294901760
    %139 = vmatmul.mubr.f32.gmra.mrb[0].mxu0 %v138
    %v140 = vpop.f32.mrb[0].mxu0
    %v141 = vadd.f32 0.0, %v140
    %v142 = vpop.f32.mrb[0].mxu0
    %143 = vdwg.mxu0
    %144 = vmatprep.subr.mxu0 0.0
    %v145 = vand.u32 %v48, 4294901760
    %v146 = vsub.f32 %v48, %v145
    %v147 = vand.u32 %v146, 4294901760
    %v148 = vsub.f32 %v146, %v147
    %v149 = vand.u32 %v148, 4294901760
    %150 = vmatpush1.msra.mxu0 %v149
    %151 = vmatprep.subr.mxu0 0.0
    %v152 = vand.u32 %v49, 4294901760
    %v153 = vsub.f32 %v49, %v152
    %v154 = vand.u32 %v153, 4294901760
    %v155 = vsub.f32 %v153, %v154
    %v156 = vand.u32 %v155, 4294901760
    %157 = vmatpush1.msra.mxu0 %v156
    %158 = vmatprep.subr.mxu0 0.0
    %159 = vmatpush1.msra.mxu0 0.0
    %160 = vmatprep.subr.mxu0 0.0
    %161 = vmatpush1.msra.mxu0 0.0
    %162 = vmatprep.subr.mxu0 0.0
    %163 = vmatpush1.msra.mxu0 0.0
    %164 = vmatprep.subr.mxu0 0.0
    %165 = vmatpush1.msra.mxu0 0.0
    %166 = vmatprep.subr.mxu0 0.0
    %167 = vmatpush1.msra.mxu0 0.0
    %168 = vmatprep.subr.mxu0 0.0
    %169 = vmatpush1.msra.mxu0 0.0
    %170 = vmatprep.subr.mxu0 0.0
    %171 = vmatpush1.msra.mxu0 0.0
    %172 = vmatprep.subr.mxu0 0.0
    %173 = vmatpush1.msra.mxu0 0.0
    %174 = vmatprep.subr.mxu0 0.0
    %175 = vmatpush1.msra.mxu0 0.0
    %176 = vmatprep.subr.mxu0 0.0
    %177 = vmatpush1.msra.mxu0 0.0
    %178 = vmatprep.subr.mxu0 0.0
    %179 = vmatpush1.msra.mxu0 0.0
    %180 = vmatprep.subr.mxu0 0.0
    %181 = vmatpush1.msra.mxu0 0.0
    %182 = vmatprep.subr.mxu0 0.0
    %183 = vmatpush1.msra.mxu0 0.0
    %184 = vmatprep.subr.mxu0 0.0
    %185 = vmatpush1.msra.mxu0 0.0
    %186 = vmatprep.subr.mxu0 0.0
    %187 = vmatpush1.msra.mxu0 0.0
    %188 = vmatprep.subr.mxu0 0.0
    %189 = vmatpush1.msra.mxu0 0.0
    %190 = vmatprep.subr.mxu0 0.0
    %191 = vmatpush1.msra.mxu0 0.0
    %192 = vmatprep.subr.mxu0 0.0
    %193 = vmatpush1.msra.mxu0 0.0
    %194 = vmatprep.subr.mxu0 0.0
    %195 = vmatpush1.msra.mxu0 0.0
    %196 = vmatprep.subr.mxu0 0.0
    %197 = vmatpush1.msra.mxu0 0.0
    %198 = vmatprep.subr.mxu0 0.0
    %199 = vmatpush1.msra.mxu0 0.0
    %200 = vmatprep.subr.mxu0 0.0
    %201 = vmatpush1.msra.mxu0 0.0
    %202 = vmatprep.subr.mxu0 0.0
    %203 = vmatpush1.msra.mxu0 0.0
    %204 = vmatprep.subr.mxu0 0.0
    %205 = vmatpush1.msra.mxu0 0.0
    %206 = vmatprep.subr.mxu0 0.0
    %207 = vmatpush1.msra.mxu0 0.0
    %208 = vmatprep.subr.mxu0 0.0
    %209 = vmatpush1.msra.mxu0 0.0
    %210 = vmatprep.subr.mxu0 0.0
    %211 = vmatpush1.msra.mxu0 0.0
    %212 = vmatprep.subr.mxu0 0.0
    %213 = vmatpush1.msra.mxu0 0.0
    %214 = vmatprep.subr.mxu0 0.0
    %215 = vmatpush1.msra.mxu0 0.0
    %216 = vmatprep.subr.mxu0 0.0
    %217 = vmatpush1.msra.mxu0 0.0
    %218 = vmatprep.mubr.f32.mxu0 0.0
    %v219 = vand.u32 %v52, 4294901760
    %220 = vmatmul.mubr.f32.gmra.mrb[0].mxu0 %v219
    %v221 = vpop.f32.mrb[0].mxu0
    %v222 = vadd.f32 %v131, %v221
    %v223 = vpop.f32.mrb[0].mxu0
    %224 = vmatprep.mubr.f32.mxu0 0.0
    %v225 = vand.u32 %v55, 4294901760
    %226 = vmatmul.mubr.f32.gmra.mrb[0].mxu0 %v225
    %v227 = vpop.f32.mrb[0].mxu0
    %v228 = vadd.f32 %v141, %v227
    %v229 = vpop.f32.mrb[0].mxu0
    %230 = vdwg.mxu0
    %231 = vmatprep.subr.mxu0 0.0
    %v232 = vand.u32 %v48, 4294901760
    %v233 = vsub.f32 %v48, %v232
    %234 = vmatpush1.msra.mxu0 %v233
    %235 = vmatprep.subr.mxu0 0.0
    %v236 = vand.u32 %v49, 4294901760
    %v237 = vsub.f32 %v49, %v236
    %238 = vmatpush1.msra.mxu0 %v237
    %239 = vmatprep.subr.mxu0 0.0
    %240 = vmatpush1.msra.mxu0 0.0
    %241 = vmatprep.subr.mxu0 0.0
    %242 = vmatpush1.msra.mxu0 0.0
    %243 = vmatprep.subr.mxu0 0.0
    %244 = vmatpush1.msra.mxu0 0.0
    %245 = vmatprep.subr.mxu0 0.0
    %246 = vmatpush1.msra.mxu0 0.0
    %247 = vmatprep.subr.mxu0 0.0
    %248 = vmatpush1.msra.mxu0 0.0
    %249 = vmatprep.subr.mxu0 0.0
    %250 = vmatpush1.msra.mxu0 0.0
    %251 = vmatprep.subr.mxu0 0.0
    %252 = vmatpush1.msra.mxu0 0.0
    %253 = vmatprep.subr.mxu0 0.0
    %254 = vmatpush1.msra.mxu0 0.0
    %255 = vmatprep.subr.mxu0 0.0
    %256 = vmatpush1.msra.mxu0 0.0
    %257 = vmatprep.subr.mxu0 0.0
    %258 = vmatpush1.msra.mxu0 0.0
    %259 = vmatprep.subr.mxu0 0.0
    %260 = vmatpush1.msra.mxu0 0.0
    %261 = vmatprep.subr.mxu0 0.0
    %262 = vmatpush1.msra.mxu0 0.0
    %263 = vmatprep.subr.mxu0 0.0
    %264 = vmatpush1.msra.mxu0 0.0
    %265 = vmatprep.subr.mxu0 0.0
    %266 = vmatpush1.msra.mxu0 0.0
    %267 = vmatprep.subr.mxu0 0.0
    %268 = vmatpush1.msra.mxu0 0.0
    %269 = vmatprep.subr.mxu0 0.0
    %270 = vmatpush1.msra.mxu0 0.0
    %271 = vmatprep.subr.mxu0 0.0
    %272 = vmatpush1.msra.mxu0 0.0
    %273 = vmatprep.subr.mxu0 0.0
    %274 = vmatpush1.msra.mxu0 0.0
    %275 = vmatprep.subr.mxu0 0.0
    %276 = vmatpush1.msra.mxu0 0.0
    %277 = vmatprep.subr.mxu0 0.0
    %278 = vmatpush1.msra.mxu0 0.0
    %279 = vmatprep.subr.mxu0 0.0
    %280 = vmatpush1.msra.mxu0 0.0
    %281 = vmatprep.subr.mxu0 0.0
    %282 = vmatpush1.msra.mxu0 0.0
    %283 = vmatprep.subr.mxu0 0.0
    %284 = vmatpush1.msra.mxu0 0.0
    %285 = vmatprep.subr.mxu0 0.0
    %286 = vmatpush1.msra.mxu0 0.0
    %287 = vmatprep.subr.mxu0 0.0
    %288 = vmatpush1.msra.mxu0 0.0
    %289 = vmatprep.subr.mxu0 0.0
    %290 = vmatpush1.msra.mxu0 0.0
    %291 = vmatprep.subr.mxu0 0.0
    %292 = vmatpush1.msra.mxu0 0.0
    %293 = vmatprep.subr.mxu0 0.0
    %294 = vmatpush1.msra.mxu0 0.0
    %295 = vmatprep.subr.mxu0 0.0
    %296 = vmatpush1.msra.mxu0 0.0
    %297 = vmatprep.subr.mxu0 0.0
    %298 = vmatpush1.msra.mxu0 0.0
    %299 = vmatprep.mubr.f32.mxu0 0.0
    %v300 = vand.u32 %v52, 4294901760
    %v301 = vsub.f32 %v52, %v300
    %302 = vmatmul.mubr.f32.gmra.mrb[0].mxu0 %v301
    %v303 = vpop.f32.mrb[0].mxu0
    %v304 = vadd.f32 %v222, %v303
    %v305 = vpop.f32.mrb[0].mxu0
    %306 = vmatprep.mubr.f32.mxu0 0.0
    %v307 = vand.u32 %v55, 4294901760
    %v308 = vsub.f32 %v55, %v307
    %309 = vmatmul.mubr.f32.gmra.mrb[0].mxu0 %v308
    %v310 = vpop.f32.mrb[0].mxu0
    %v311 = vadd.f32 %v228, %v310
    %v312 = vpop.f32.mrb[0].mxu0
    %313 = vdwg.mxu0
    %314 = vmatprep.subr.mxu0 0.0
    %v315 = vand.u32 %v48, 4294901760
    %316 = vmatpush1.msra.mxu0 %v315
    %317 = vmatprep.subr.mxu0 0.0
    %v318 = vand.u32 %v49, 4294901760
    %319 = vmatpush1.msra.mxu0 %v318
    %320 = vmatprep.subr.mxu0 0.0
    %321 = vmatpush1.msra.mxu0 0.0
    %322 = vmatprep.subr.mxu0 0.0
    %323 = vmatpush1.msra.mxu0 0.0
    %324 = vmatprep.subr.mxu0 0.0
    %325 = vmatpush1.msra.mxu0 0.0
    %326 = vmatprep.subr.mxu0 0.0
    %327 = vmatpush1.msra.mxu0 0.0
    %328 = vmatprep.subr.mxu0 0.0
    %329 = vmatpush1.msra.mxu0 0.0
    %330 = vmatprep.subr.mxu0 0.0
    %331 = vmatpush1.msra.mxu0 0.0
    %332 = vmatprep.subr.mxu0 0.0
    %333 = vmatpush1.msra.mxu0 0.0
    %334 = vmatprep.subr.mxu0 0.0
    %335 = vmatpush1.msra.mxu0 0.0
    %336 = vmatprep.subr.mxu0 0.0
    %337 = vmatpush1.msra.mxu0 0.0
    %338 = vmatprep.subr.mxu0 0.0
    %339 = vmatpush1.msra.mxu0 0.0
    %340 = vmatprep.subr.mxu0 0.0
    %341 = vmatpush1.msra.mxu0 0.0
    %342 = vmatprep.subr.mxu0 0.0
    %343 = vmatpush1.msra.mxu0 0.0
    %344 = vmatprep.subr.mxu0 0.0
    %345 = vmatpush1.msra.mxu0 0.0
    %346 = vmatprep.subr.mxu0 0.0
    %347 = vmatpush1.msra.mxu0 0.0
    %348 = vmatprep.subr.mxu0 0.0
    %349 = vmatpush1.msra.mxu0 0.0
    %350 = vmatprep.subr.mxu0 0.0
    %351 = vmatpush1.msra.mxu0 0.0
    %352 = vmatprep.subr.mxu0 0.0
    %353 = vmatpush1.msra.mxu0 0.0
    %354 = vmatprep.subr.mxu0 0.0
    %355 = vmatpush1.msra.mxu0 0.0
    %356 = vmatprep.subr.mxu0 0.0
    %357 = vmatpush1.msra.mxu0 0.0
    %358 = vmatprep.subr.mxu0 0.0
    %359 = vmatpush1.msra.mxu0 0.0
    %360 = vmatprep.subr.mxu0 0.0
    %361 = vmatpush1.msra.mxu0 0.0
    %362 = vmatprep.subr.mxu0 0.0
    %363 = vmatpush1.msra.mxu0 0.0
    %364 = vmatprep.subr.mxu0 0.0
    %365 = vmatpush1.msra.mxu0 0.0
    %366 = vmatprep.subr.mxu0 0.0
    %367 = vmatpush1.msra.mxu0 0.0
    %368 = vmatprep.subr.mxu0 0.0
    %369 = vmatpush1.msra.mxu0 0.0
    %370 = vmatprep.subr.mxu0 0.0
    %371 = vmatpush1.msra.mxu0 0.0
    %372 = vmatprep.subr.mxu0 0.0
    %373 = vmatpush1.msra.mxu0 0.0
    %374 = vmatprep.subr.mxu0 0.0
    %375 = vmatpush1.msra.mxu0 0.0
    %376 = vmatprep.subr.mxu0 0.0
    %377 = vmatpush1.msra.mxu0 0.0
    %378 = vmatprep.subr.mxu0 0.0
    %379 = vmatpush1.msra.mxu0 0.0
    %380 = vmatprep.mubr.f32.mxu0 0.0
    %v381 = vand.u32 %v52, 4294901760
    %v382 = vsub.f32 %v52, %v381
    %v383 = vand.u32 %v382, 4294901760
    %384 = vmatmul.mubr.f32.gmra.mrb[0].mxu0 %v383
    %v385 = vpop.f32.mrb[0].mxu0
    %v386 = vadd.f32 %v304, %v385
    %v387 = vpop.f32.mrb[0].mxu0
    %388 = vmatprep.mubr.f32.mxu0 0.0
    %v389 = vand.u32 %v55, 4294901760
    %v390 = vsub.f32 %v55, %v389
    %v391 = vand.u32 %v390, 4294901760
    %392 = vmatmul.mubr.f32.gmra.mrb[0].mxu0 %v391
    %v393 = vpop.f32.mrb[0].mxu0
    %v394 = vadd.f32 %v311, %v393
    %v395 = vpop.f32.mrb[0].mxu0
    %396 = vdwg.mxu0
    %397 = vmatprep.subr.mxu0 0.0
    %v398 = vand.u32 %v48, 4294901760
    %v399 = vsub.f32 %v48, %v398
    %v400 = vand.u32 %v399, 4294901760
    %401 = vmatpush1.msra.mxu0 %v400
    %402 = vmatprep.subr.mxu0 0.0
    %v403 = vand.u32 %v49, 4294901760
    %v404 = vsub.f32 %v49, %v403
    %v405 = vand.u32 %v404, 4294901760
    %406 = vmatpush1.msra.mxu0 %v405
    %407 = vmatprep.subr.mxu0 0.0
    %408 = vmatpush1.msra.mxu0 0.0
    %409 = vmatprep.subr.mxu0 0.0
    %410 = vmatpush1.msra.mxu0 0.0
    %411 = vmatprep.subr.mxu0 0.0
    %412 = vmatpush1.msra.mxu0 0.0
    %413 = vmatprep.subr.mxu0 0.0
    %414 = vmatpush1.msra.mxu0 0.0
    %415 = vmatprep.subr.mxu0 0.0
    %416 = vmatpush1.msra.mxu0 0.0
    %417 = vmatprep.subr.mxu0 0.0
    %418 = vmatpush1.msra.mxu0 0.0
    %419 = vmatprep.subr.mxu0 0.0
    %420 = vmatpush1.msra.mxu0 0.0
    %421 = vmatprep.subr.mxu0 0.0
    %422 = vmatpush1.msra.mxu0 0.0
    %423 = vmatprep.subr.mxu0 0.0
    %424 = vmatpush1.msra.mxu0 0.0
    %425 = vmatprep.subr.mxu0 0.0
    %426 = vmatpush1.msra.mxu0 0.0
    %427 = vmatprep.subr.mxu0 0.0
    %428 = vmatpush1.msra.mxu0 0.0
    %429 = vmatprep.subr.mxu0 0.0
    %430 = vmatpush1.msra.mxu0 0.0
    %431 = vmatprep.subr.mxu0 0.0
    %432 = vmatpush1.msra.mxu0 0.0
    %433 = vmatprep.subr.mxu0 0.0
    %434 = vmatpush1.msra.mxu0 0.0
    %435 = vmatprep.subr.mxu0 0.0
    %436 = vmatpush1.msra.mxu0 0.0
    %437 = vmatprep.subr.mxu0 0.0
    %438 = vmatpush1.msra.mxu0 0.0
    %439 = vmatprep.subr.mxu0 0.0
    %440 = vmatpush1.msra.mxu0 0.0
    %441 = vmatprep.subr.mxu0 0.0
    %442 = vmatpush1.msra.mxu0 0.0
    %443 = vmatprep.subr.mxu0 0.0
    %444 = vmatpush1.msra.mxu0 0.0
    %445 = vmatprep.subr.mxu0 0.0
    %446 = vmatpush1.msra.mxu0 0.0
    %447 = vmatprep.subr.mxu0 0.0
    %448 = vmatpush1.msra.mxu0 0.0
    %449 = vmatprep.subr.mxu0 0.0
    %450 = vmatpush1.msra.mxu0 0.0
    %451 = vmatprep.subr.mxu0 0.0
    %452 = vmatpush1.msra.mxu0 0.0
    %453 = vmatprep.subr.mxu0 0.0
    %454 = vmatpush1.msra.mxu0 0.0
    %455 = vmatprep.subr.mxu0 0.0
    %456 = vmatpush1.msra.mxu0 0.0
    %457 = vmatprep.subr.mxu0 0.0
    %458 = vmatpush1.msra.mxu0 0.0
    %459 = vmatprep.subr.mxu0 0.0
    %460 = vmatpush1.msra.mxu0 0.0
    %461 = vmatprep.subr.mxu0 0.0
    %462 = vmatpush1.msra.mxu0 0.0
    %463 = vmatprep.subr.mxu0 0.0
    %464 = vmatpush1.msra.mxu0 0.0
    %465 = vmatprep.subr.mxu0 0.0
    %466 = vmatpush1.msra.mxu0 0.0
    %467 = vmatprep.mubr.f32.mxu0 0.0
    %v468 = vand.u32 %v52, 4294901760
    %469 = vmatmul.mubr.f32.gmra.mrb[0].mxu0 %v468
    %v470 = vpop.f32.mrb[0].mxu0
    %v471 = vadd.f32 %v386, %v470
    %v472 = vpop.f32.mrb[0].mxu0
    %473 = vmatprep.mubr.f32.mxu0 0.0
    %v474 = vand.u32 %v55, 4294901760
    %475 = vmatmul.mubr.f32.gmra.mrb[0].mxu0 %v474
    %v476 = vpop.f32.mrb[0].mxu0
    %v477 = vadd.f32 %v394, %v476
    %v478 = vpop.f32.mrb[0].mxu0
    %479 = vdwg.mxu0
    %480 = vmatprep.subr.mxu0 0.0
    %v481 = vand.u32 %v48, 4294901760
    %482 = vmatpush1.msra.mxu0 %v481
    %483 = vmatprep.subr.mxu0 0.0
    %v484 = vand.u32 %v49, 4294901760
    %485 = vmatpush1.msra.mxu0 %v484
    %486 = vmatprep.subr.mxu0 0.0
    %487 = vmatpush1.msra.mxu0 0.0
    %488 = vmatprep.subr.mxu0 0.0
    %489 = vmatpush1.msra.mxu0 0.0
    %490 = vmatprep.subr.mxu0 0.0
    %491 = vmatpush1.msra.mxu0 0.0
    %492 = vmatprep.subr.mxu0 0.0
    %493 = vmatpush1.msra.mxu0 0.0
    %494 = vmatprep.subr.mxu0 0.0
    %495 = vmatpush1.msra.mxu0 0.0
    %496 = vmatprep.subr.mxu0 0.0
    %497 = vmatpush1.msra.mxu0 0.0
    %498 = vmatprep.subr.mxu0 0.0
    %499 = vmatpush1.msra.mxu0 0.0
    %500 = vmatprep.subr.mxu0 0.0
    %501 = vmatpush1.msra.mxu0 0.0
    %502 = vmatprep.subr.mxu0 0.0
    %503 = vmatpush1.msra.mxu0 0.0
    %504 = vmatprep.subr.mxu0 0.0
    %505 = vmatpush1.msra.mxu0 0.0
    %506 = vmatprep.subr.mxu0 0.0
    %507 = vmatpush1.msra.mxu0 0.0
    %508 = vmatprep.subr.mxu0 0.0
    %509 = vmatpush1.msra.mxu0 0.0
    %510 = vmatprep.subr.mxu0 0.0
    %511 = vmatpush1.msra.mxu0 0.0
    %512 = vmatprep.subr.mxu0 0.0
    %513 = vmatpush1.msra.mxu0 0.0
    %514 = vmatprep.subr.mxu0 0.0
    %515 = vmatpush1.msra.mxu0 0.0
    %516 = vmatprep.subr.mxu0 0.0
    %517 = vmatpush1.msra.mxu0 0.0
    %518 = vmatprep.subr.mxu0 0.0
    %519 = vmatpush1.msra.mxu0 0.0
    %520 = vmatprep.subr.mxu0 0.0
    %521 = vmatpush1.msra.mxu0 0.0
    %522 = vmatprep.subr.mxu0 0.0
    %523 = vmatpush1.msra.mxu0 0.0
    %524 = vmatprep.subr.mxu0 0.0
    %525 = vmatpush1.msra.mxu0 0.0
    %526 = vmatprep.subr.mxu0 0.0
    %527 = vmatpush1.msra.mxu0 0.0
    %528 = vmatprep.subr.mxu0 0.0
    %529 = vmatpush1.msra.mxu0 0.0
    %530 = vmatprep.subr.mxu0 0.0
    %531 = vmatpush1.msra.mxu0 0.0
    %532 = vmatprep.subr.mxu0 0.0
    %533 = vmatpush1.msra.mxu0 0.0
    %534 = vmatprep.subr.mxu0 0.0
    %535 = vmatpush1.msra.mxu0 0.0
    %536 = vmatprep.subr.mxu0 0.0
    %537 = vmatpush1.msra.mxu0 0.0
    %538 = vmatprep.subr.mxu0 0.0
    %539 = vmatpush1.msra.mxu0 0.0
    %540 = vmatprep.subr.mxu0 0.0
    %541 = vmatpush1.msra.mxu0 0.0
    %542 = vmatprep.subr.mxu0 0.0
    %543 = vmatpush1.msra.mxu0 0.0
    %544 = vmatprep.subr.mxu0 0.0
    %545 = vmatpush1.msra.mxu0 0.0
    %546 = vmatprep.mubr.f32.mxu0 0.0
    %v547 = vand.u32 %v52, 4294901760
    %548 = vmatmul.mubr.f32.gmra.mrb[0].mxu0 %v547
    %v549 = vpop.f32.mrb[0].mxu0
    %v550 = vadd.f32 %v471, %v549
    %v551 = vpop.f32.mrb[0].mxu0
    %552 = vmatprep.mubr.f32.mxu0 0.0
    %v553 = vand.u32 %v55, 4294901760
    %554 = vmatmul.mubr.f32.gmra.mrb[0].mxu0 %v553
    %v555 = vpop.f32.mrb[0].mxu0
    %v556 = vadd.f32 %v477, %v555
    %v557 = vpop.f32.mrb[0].mxu0
    %558 = vdwg.mxu0
    %v559 = vld [vmem:[#allocation2] sm:$0xff]
    %v560 = vld [vmem:[#allocation2 + $0x8] sm:$0xff]
    %v561 = vld [vmem:[#allocation2 + $0x10] sm:$0xff]
    %v562 = vld [vmem:[#allocation2 + $0x18] sm:$0xff]
    %v563 = vld [vmem:[#allocation2 + $0x20] sm:$0xff]
    %v564 = vld [vmem:[#allocation2 + $0x28] sm:$0xff]
    %v565 = vld [vmem:[#allocation2 + $0x30] sm:$0xff]
    %v566 = vld [vmem:[#allocation2 + $0x38] sm:$0xff]
    %v567 = vld [vmem:[#allocation2 + $0x40] sm:$0xff]
    %v568 = vld [vmem:[#allocation2 + $0x48] sm:$0xff]
    %v569 = vld [vmem:[#allocation2 + $0x50] sm:$0xff]
    %v570 = vld [vmem:[#allocation2 + $0x58] sm:$0xff]
    %v571 = vld [vmem:[#allocation2 + $0x60] sm:$0xff]
    %v572 = vld [vmem:[#allocation2 + $0x68] sm:$0xff]
    %v573 = vld [vmem:[#allocation2 + $0x70] sm:$0xff]
    %v574 = vld [vmem:[#allocation2 + $0x78] sm:$0xff]
    %v575 = vld [vmem:[%s3] sm:$0x1]
    %v577 = vlaneseq
    %v578 = vshrl.u32 %v577, 7
    %v579 = vsub.s32 0, %v578
    %v580 = vrot.slane %v575, %v579
    %582 = vmatprep.subr.mxu0 0.0
    %v583 = vand.u32 %v559, 4294901760
    %584 = vmatpush1.msra.mxu0 %v583
    %585 = vmatprep.subr.mxu0 0.0
    %v586 = vand.u32 %v560, 4294901760
    %587 = vmatpush1.msra.mxu0 %v586
    %588 = vmatprep.subr.mxu0 0.0
    %v589 = vand.u32 %v561, 4294901760
    %590 = vmatpush1.msra.mxu0 %v589
    %591 = vmatprep.subr.mxu0 0.0
    %v592 = vand.u32 %v562, 4294901760
    %593 = vmatpush1.msra.mxu0 %v592
    %594 = vmatprep.subr.mxu0 0.0
    %v595 = vand.u32 %v563, 4294901760
    %596 = vmatpush1.msra.mxu0 %v595
    %597 = vmatprep.subr.mxu0 0.0
    %v598 = vand.u32 %v564, 4294901760
    %599 = vmatpush1.msra.mxu0 %v598
    %600 = vmatprep.subr.mxu0 0.0
    %v601 = vand.u32 %v565, 4294901760
    %602 = vmatpush1.msra.mxu0 %v601
    %603 = vmatprep.subr.mxu0 0.0
    %v604 = vand.u32 %v566, 4294901760
    %605 = vmatpush1.msra.mxu0 %v604
    %606 = vmatprep.subr.mxu0 0.0
    %v607 = vand.u32 %v567, 4294901760
    %608 = vmatpush1.msra.mxu0 %v607
    %609 = vmatprep.subr.mxu0 0.0
    %v610 = vand.u32 %v568, 4294901760
    %611 = vmatpush1.msra.mxu0 %v610
    %612 = vmatprep.subr.mxu0 0.0
    %v613 = vand.u32 %v569, 4294901760
    %614 = vmatpush1.msra.mxu0 %v613
    %615 = vmatprep.subr.mxu0 0.0
    %v616 = vand.u32 %v570, 4294901760
    %617 = vmatpush1.msra.mxu0 %v616
    %618 = vmatprep.subr.mxu0 0.0
    %v619 = vand.u32 %v571, 4294901760
    %620 = vmatpush1.msra.mxu0 %v619
    %621 = vmatprep.subr.mxu0 0.0
    %v622 = vand.u32 %v572, 4294901760
    %623 = vmatpush1.msra.mxu0 %v622
    %624 = vmatprep.subr.mxu0 0.0
    %v625 = vand.u32 %v573, 4294901760
    %626 = vmatpush1.msra.mxu0 %v625
    %627 = vmatprep.subr.mxu0 0.0
    %v628 = vand.u32 %v574, 4294901760
    %629 = vmatpush1.msra.mxu0 %v628
    %630 = vmatprep.subr.mxu0 0.0
    %631 = vmatpush1.msra.mxu0 0.0
    %632 = vmatprep.subr.mxu0 0.0
    %633 = vmatpush1.msra.mxu0 0.0
    %634 = vmatprep.subr.mxu0 0.0
    %635 = vmatpush1.msra.mxu0 0.0
    %636 = vmatprep.subr.mxu0 0.0
    %637 = vmatpush1.msra.mxu0 0.0
    %638 = vmatprep.subr.mxu0 0.0
    %639 = vmatpush1.msra.mxu0 0.0
    %640 = vmatprep.subr.mxu0 0.0
    %641 = vmatpush1.msra.mxu0 0.0
    %642 = vmatprep.subr.mxu0 0.0
    %643 = vmatpush1.msra.mxu0 0.0
    %644 = vmatprep.subr.mxu0 0.0
    %645 = vmatpush1.msra.mxu0 0.0
    %646 = vmatprep.subr.mxu0 0.0
    %647 = vmatpush1.msra.mxu0 0.0
    %648 = vmatprep.subr.mxu0 0.0
    %649 = vmatpush1.msra.mxu0 0.0
    %650 = vmatprep.subr.mxu0 0.0
    %651 = vmatpush1.msra.mxu0 0.0
    %652 = vmatprep.subr.mxu0 0.0
    %653 = vmatpush1.msra.mxu0 0.0
    %654 = vmatprep.subr.mxu0 0.0
    %655 = vmatpush1.msra.mxu0 0.0
    %656 = vmatprep.subr.mxu0 0.0
    %657 = vmatpush1.msra.mxu0 0.0
    %658 = vmatprep.subr.mxu0 0.0
    %659 = vmatpush1.msra.mxu0 0.0
    %660 = vmatprep.subr.mxu0 0.0
    %661 = vmatpush1.msra.mxu0 0.0
    %662 = vmatprep.mubr.f32.mxu0 0.0
    %v663 = vand.u32 %v550, 4294901760
    %v664 = vsub.f32 %v550, %v663
    %v665 = vand.u32 %v664, 4294901760
    %v666 = vsub.f32 %v664, %v665
    %v667 = vand.u32 %v666, 4294901760
    %668 = vmatmul.mubr.f32.gmra.mrb[0].mxu0 %v667
    %v669 = vpop.f32.mrb[0].mxu0
    %v670 = vadd.f32 %v580, %v669
    %v671 = vpop.f32.mrb[0].mxu0
    %672 = vmatprep.mubr.f32.mxu0 0.0
    %v673 = vand.u32 %v556, 4294901760
    %v674 = vsub.f32 %v556, %v673
    %v675 = vand.u32 %v674, 4294901760
    %v676 = vsub.f32 %v674, %v675
    %v677 = vand.u32 %v676, 4294901760
    %678 = vmatmul.mubr.f32.gmra.mrb[0].mxu0 %v677
    %v679 = vpop.f32.mrb[0].mxu0
    %v680 = vadd.f32 %v580, %v679
    %v681 = vpop.f32.mrb[0].mxu0
    %682 = vdwg.mxu0
    %683 = vmatprep.subr.mxu0 0.0
    %v684 = vand.u32 %v559, 4294901760
    %v685 = vsub.f32 %v559, %v684
    %v686 = vand.u32 %v685, 4294901760
    %v687 = vsub.f32 %v685, %v686
    %v688 = vand.u32 %v687, 4294901760
    %689 = vmatpush1.msra.mxu0 %v688
    %690 = vmatprep.subr.mxu0 0.0
    %v691 = vand.u32 %v560, 4294901760
    %v692 = vsub.f32 %v560, %v691
    %v693 = vand.u32 %v692, 4294901760
    %v694 = vsub.f32 %v692, %v693
    %v695 = vand.u32 %v694, 4294901760
    %696 = vmatpush1.msra.mxu0 %v695
    %697 = vmatprep.subr.mxu0 0.0
    %v698 = vand.u32 %v561, 4294901760
    %v699 = vsub.f32 %v561, %v698
    %v700 = vand.u32 %v699, 4294901760
    %v701 = vsub.f32 %v699, %v700
    %v702 = vand.u32 %v701, 4294901760
    %703 = vmatpush1.msra.mxu0 %v702
    %704 = vmatprep.subr.mxu0 0.0
    %v705 = vand.u32 %v562, 4294901760
    %v706 = vsub.f32 %v562, %v705
    %v707 = vand.u32 %v706, 4294901760
    %v708 = vsub.f32 %v706, %v707
    %v709 = vand.u32 %v708, 4294901760
    %710 = vmatpush1.msra.mxu0 %v709
    %711 = vmatprep.subr.mxu0 0.0
    %v712 = vand.u32 %v563, 4294901760
    %v713 = vsub.f32 %v563, %v712
    %v714 = vand.u32 %v713, 4294901760
    %v715 = vsub.f32 %v713, %v714
    %v716 = vand.u32 %v715, 4294901760
    %717 = vmatpush1.msra.mxu0 %v716
    %718 = vmatprep.subr.mxu0 0.0
    %v719 = vand.u32 %v564, 4294901760
    %v720 = vsub.f32 %v564, %v719
    %v721 = vand.u32 %v720, 4294901760
    %v722 = vsub.f32 %v720, %v721
    %v723 = vand.u32 %v722, 4294901760
    %724 = vmatpush1.msra.mxu0 %v723
    %725 = vmatprep.subr.mxu0 0.0
    %v726 = vand.u32 %v565, 4294901760
    %v727 = vsub.f32 %v565, %v726
    %v728 = vand.u32 %v727, 4294901760
    %v729 = vsub.f32 %v727, %v728
    %v730 = vand.u32 %v729, 4294901760
    %731 = vmatpush1.msra.mxu0 %v730
    %732 = vmatprep.subr.mxu0 0.0
    %v733 = vand.u32 %v566, 4294901760
    %v734 = vsub.f32 %v566, %v733
    %v735 = vand.u32 %v734, 4294901760
    %v736 = vsub.f32 %v734, %v735
    %v737 = vand.u32 %v736, 4294901760
    %738 = vmatpush1.msra.mxu0 %v737
    %739 = vmatprep.subr.mxu0 0.0
    %v740 = vand.u32 %v567, 4294901760
    %v741 = vsub.f32 %v567, %v740
    %v742 = vand.u32 %v741, 4294901760
    %v743 = vsub.f32 %v741, %v742
    %v744 = vand.u32 %v743, 4294901760
    %745 = vmatpush1.msra.mxu0 %v744
    %746 = vmatprep.subr.mxu0 0.0
    %v747 = vand.u32 %v568, 4294901760
    %v748 = vsub.f32 %v568, %v747
    %v749 = vand.u32 %v748, 4294901760
    %v750 = vsub.f32 %v748, %v749
    %v751 = vand.u32 %v750, 4294901760
    %752 = vmatpush1.msra.mxu0 %v751
    %753 = vmatprep.subr.mxu0 0.0
    %v754 = vand.u32 %v569, 4294901760
    %v755 = vsub.f32 %v569, %v754
    %v756 = vand.u32 %v755, 4294901760
    %v757 = vsub.f32 %v755, %v756
    %v758 = vand.u32 %v757, 4294901760
    %759 = vmatpush1.msra.mxu0 %v758
    %760 = vmatprep.subr.mxu0 0.0
    %v761 = vand.u32 %v570, 4294901760
    %v762 = vsub.f32 %v570, %v761
    %v763 = vand.u32 %v762, 4294901760
    %v764 = vsub.f32 %v762, %v763
    %v765 = vand.u32 %v764, 4294901760
    %766 = vmatpush1.msra.mxu0 %v765
    %767 = vmatprep.subr.mxu0 0.0
    %v768 = vand.u32 %v571, 4294901760
    %v769 = vsub.f32 %v571, %v768
    %v770 = vand.u32 %v769, 4294901760
    %v771 = vsub.f32 %v769, %v770
    %v772 = vand.u32 %v771, 4294901760
    %773 = vmatpush1.msra.mxu0 %v772
    %774 = vmatprep.subr.mxu0 0.0
    %v775 = vand.u32 %v572, 4294901760
    %v776 = vsub.f32 %v572, %v775
    %v777 = vand.u32 %v776, 4294901760
    %v778 = vsub.f32 %v776, %v777
    %v779 = vand.u32 %v778, 4294901760
    %780 = vmatpush1.msra.mxu0 %v779
    %781 = vmatprep.subr.mxu0 0.0
    %v782 = vand.u32 %v573, 4294901760
    %v783 = vsub.f32 %v573, %v782
    %v784 = vand.u32 %v783, 4294901760
    %v785 = vsub.f32 %v783, %v784
    %v786 = vand.u32 %v785, 4294901760
    %787 = vmatpush1.msra.mxu0 %v786
    %788 = vmatprep.subr.mxu0 0.0
    %v789 = vand.u32 %v574, 4294901760
    %v790 = vsub.f32 %v574, %v789
    %v791 = vand.u32 %v790, 4294901760
    %v792 = vsub.f32 %v790, %v791
    %v793 = vand.u32 %v792, 4294901760
    %794 = vmatpush1.msra.mxu0 %v793
    %795 = vmatprep.subr.mxu0 0.0
    %796 = vmatpush1.msra.mxu0 0.0
    %797 = vmatprep.subr.mxu0 0.0
    %798 = vmatpush1.msra.mxu0 0.0
    %799 = vmatprep.subr.mxu0 0.0
    %800 = vmatpush1.msra.mxu0 0.0
    %801 = vmatprep.subr.mxu0 0.0
    %802 = vmatpush1.msra.mxu0 0.0
    %803 = vmatprep.subr.mxu0 0.0
    %804 = vmatpush1.msra.mxu0 0.0
    %805 = vmatprep.subr.mxu0 0.0
    %806 = vmatpush1.msra.mxu0 0.0
    %807 = vmatprep.subr.mxu0 0.0
    %808 = vmatpush1.msra.mxu0 0.0
    %809 = vmatprep.subr.mxu0 0.0
    %810 = vmatpush1.msra.mxu0 0.0
    %811 = vmatprep.subr.mxu0 0.0
    %812 = vmatpush1.msra.mxu0 0.0
    %813 = vmatprep.subr.mxu0 0.0
    %814 = vmatpush1.msra.mxu0 0.0
    %815 = vmatprep.subr.mxu0 0.0
    %816 = vmatpush1.msra.mxu0 0.0
    %817 = vmatprep.subr.mxu0 0.0
    %818 = vmatpush1.msra.mxu0 0.0
    %819 = vmatprep.subr.mxu0 0.0
    %820 = vmatpush1.msra.mxu0 0.0
    %821 = vmatprep.subr.mxu0 0.0
    %822 = vmatpush1.msra.mxu0 0.0
    %823 = vmatprep.subr.mxu0 0.0
    %824 = vmatpush1.msra.mxu0 0.0
    %825 = vmatprep.subr.mxu0 0.0
    %826 = vmatpush1.msra.mxu0 0.0
    %827 = vmatprep.mubr.f32.mxu0 0.0
    %v828 = vand.u32 %v550, 4294901760
    %829 = vmatmul.mubr.f32.gmra.mrb[0].mxu0 %v828
    %v830 = vpop.f32.mrb[0].mxu0
    %v831 = vadd.f32 %v670, %v830
    %v832 = vpop.f32.mrb[0].mxu0
    %833 = vmatprep.mubr.f32.mxu0 0.0
    %v834 = vand.u32 %v556, 4294901760
    %835 = vmatmul.mubr.f32.gmra.mrb[0].mxu0 %v834
    %v836 = vpop.f32.mrb[0].mxu0
    %v837 = vadd.f32 %v680, %v836
    %v838 = vpop.f32.mrb[0].mxu0
    %839 = vdwg.mxu0
    %840 = vmatprep.subr.mxu0 0.0
    %v841 = vand.u32 %v559, 4294901760
    %v842 = vsub.f32 %v559, %v841
    %843 = vmatpush1.msra.mxu0 %v842
    %844 = vmatprep.subr.mxu0 0.0
    %v845 = vand.u32 %v560, 4294901760
    %v846 = vsub.f32 %v560, %v845
    %847 = vmatpush1.msra.mxu0 %v846
    %848 = vmatprep.subr.mxu0 0.0
    %v849 = vand.u32 %v561, 4294901760
    %v850 = vsub.f32 %v561, %v849
    %851 = vmatpush1.msra.mxu0 %v850
    %852 = vmatprep.subr.mxu0 0.0
    %v853 = vand.u32 %v562, 4294901760
    %v854 = vsub.f32 %v562, %v853
    %855 = vmatpush1.msra.mxu0 %v854
    %856 = vmatprep.subr.mxu0 0.0
    %v857 = vand.u32 %v563, 4294901760
    %v858 = vsub.f32 %v563, %v857
    %859 = vmatpush1.msra.mxu0 %v858
    %860 = vmatprep.subr.mxu0 0.0
    %v861 = vand.u32 %v564, 4294901760
    %v862 = vsub.f32 %v564, %v861
    %863 = vmatpush1.msra.mxu0 %v862
    %864 = vmatprep.subr.mxu0 0.0
    %v865 = vand.u32 %v565, 4294901760
    %v866 = vsub.f32 %v565, %v865
    %867 = vmatpush1.msra.mxu0 %v866
    %868 = vmatprep.subr.mxu0 0.0
    %v869 = vand.u32 %v566, 4294901760
    %v870 = vsub.f32 %v566, %v869
    %871 = vmatpush1.msra.mxu0 %v870
    %872 = vmatprep.subr.mxu0 0.0
    %v873 = vand.u32 %v567, 4294901760
    %v874 = vsub.f32 %v567, %v873
    %875 = vmatpush1.msra.mxu0 %v874
    %876 = vmatprep.subr.mxu0 0.0
    %v877 = vand.u32 %v568, 4294901760
    %v878 = vsub.f32 %v568, %v877
    %879 = vmatpush1.msra.mxu0 %v878
    %880 = vmatprep.subr.mxu0 0.0
    %v881 = vand.u32 %v569, 4294901760
    %v882 = vsub.f32 %v569, %v881
    %883 = vmatpush1.msra.mxu0 %v882
    %884 = vmatprep.subr.mxu0 0.0
    %v885 = vand.u32 %v570, 4294901760
    %v886 = vsub.f32 %v570, %v885
    %887 = vmatpush1.msra.mxu0 %v886
    %888 = vmatprep.subr.mxu0 0.0
    %v889 = vand.u32 %v571, 4294901760
    %v890 = vsub.f32 %v571, %v889
    %891 = vmatpush1.msra.mxu0 %v890
    %892 = vmatprep.subr.mxu0 0.0
    %v893 = vand.u32 %v572, 4294901760
    %v894 = vsub.f32 %v572, %v893
    %895 = vmatpush1.msra.mxu0 %v894
    %896 = vmatprep.subr.mxu0 0.0
    %v897 = vand.u32 %v573, 4294901760
    %v898 = vsub.f32 %v573, %v897
    %899 = vmatpush1.msra.mxu0 %v898
    %900 = vmatprep.subr.mxu0 0.0
    %v901 = vand.u32 %v574, 4294901760
    %v902 = vsub.f32 %v574, %v901
    %903 = vmatpush1.msra.mxu0 %v902
    %904 = vmatprep.subr.mxu0 0.0
    %905 = vmatpush1.msra.mxu0 0.0
    %906 = vmatprep.subr.mxu0 0.0
    %907 = vmatpush1.msra.mxu0 0.0
    %908 = vmatprep.subr.mxu0 0.0
    %909 = vmatpush1.msra.mxu0 0.0
    %910 = vmatprep.subr.mxu0 0.0
    %911 = vmatpush1.msra.mxu0 0.0
    %912 = vmatprep.subr.mxu0 0.0
    %913 = vmatpush1.msra.mxu0 0.0
    %914 = vmatprep.subr.mxu0 0.0
    %915 = vmatpush1.msra.mxu0 0.0
    %916 = vmatprep.subr.mxu0 0.0
    %917 = vmatpush1.msra.mxu0 0.0
    %918 = vmatprep.subr.mxu0 0.0
    %919 = vmatpush1.msra.mxu0 0.0
    %920 = vmatprep.subr.mxu0 0.0
    %921 = vmatpush1.msra.mxu0 0.0
    %922 = vmatprep.subr.mxu0 0.0
    %923 = vmatpush1.msra.mxu0 0.0
    %924 = vmatprep.subr.mxu0 0.0
    %925 = vmatpush1.msra.mxu0 0.0
    %926 = vmatprep.subr.mxu0 0.0
    %927 = vmatpush1.msra.mxu0 0.0
    %928 = vmatprep.subr.mxu0 0.0
    %929 = vmatpush1.msra.mxu0 0.0
    %930 = vmatprep.subr.mxu0 0.0
    %931 = vmatpush1.msra.mxu0 0.0
    %932 = vmatprep.subr.mxu0 0.0
    %933 = vmatpush1.msra.mxu0 0.0
    %934 = vmatprep.subr.mxu0 0.0
    %935 = vmatpush1.msra.mxu0 0.0
    %936 = vmatprep.mubr.f32.mxu0 0.0
    %v937 = vand.u32 %v550, 4294901760
    %v938 = vsub.f32 %v550, %v937
    %939 = vmatmul.mubr.f32.gmra.mrb[0].mxu0 %v938
    %v940 = vpop.f32.mrb[0].mxu0
    %v941 = vadd.f32 %v831, %v940
    %v942 = vpop.f32.mrb[0].mxu0
    %943 = vmatprep.mubr.f32.mxu0 0.0
    %v944 = vand.u32 %v556, 4294901760
    %v945 = vsub.f32 %v556, %v944
    %946 = vmatmul.mubr.f32.gmra.mrb[0].mxu0 %v945
    %v947 = vpop.f32.mrb[0].mxu0
    %v948 = vadd.f32 %v837, %v947
    %v949 = vpop.f32.mrb[0].mxu0
    %950 = vdwg.mxu0
    %951 = vmatprep.subr.mxu0 0.0
    %v952 = vand.u32 %v559, 4294901760
    %953 = vmatpush1.msra.mxu0 %v952
    %954 = vmatprep.subr.mxu0 0.0
    %v955 = vand.u32 %v560, 4294901760
    %956 = vmatpush1.msra.mxu0 %v955
    %957 = vmatprep.subr.mxu0 0.0
    %v958 = vand.u32 %v561, 4294901760
    %959 = vmatpush1.msra.mxu0 %v958
    %960 = vmatprep.subr.mxu0 0.0
    %v961 = vand.u32 %v562, 4294901760
    %962 = vmatpush1.msra.mxu0 %v961
    %963 = vmatprep.subr.mxu0 0.0
    %v964 = vand.u32 %v563, 4294901760
    %965 = vmatpush1.msra.mxu0 %v964
    %966 = vmatprep.subr.mxu0 0.0
    %v967 = vand.u32 %v564, 4294901760
    %968 = vmatpush1.msra.mxu0 %v967
    %969 = vmatprep.subr.mxu0 0.0
    %v970 = vand.u32 %v565, 4294901760
    %971 = vmatpush1.msra.mxu0 %v970
    %972 = vmatprep.subr.mxu0 0.0
    %v973 = vand.u32 %v566, 4294901760
    %974 = vmatpush1.msra.mxu0 %v973
    %975 = vmatprep.subr.mxu0 0.0
    %v976 = vand.u32 %v567, 4294901760
    %977 = vmatpush1.msra.mxu0 %v976
    %978 = vmatprep.subr.mxu0 0.0
    %v979 = vand.u32 %v568, 4294901760
    %980 = vmatpush1.msra.mxu0 %v979
    %981 = vmatprep.subr.mxu0 0.0
    %v982 = vand.u32 %v569, 4294901760
    %983 = vmatpush1.msra.mxu0 %v982
    %984 = vmatprep.subr.mxu0 0.0
    %v985 = vand.u32 %v570, 4294901760
    %986 = vmatpush1.msra.mxu0 %v985
    %987 = vmatprep.subr.mxu0 0.0
    %v988 = vand.u32 %v571, 4294901760
    %989 = vmatpush1.msra.mxu0 %v988
    %990 = vmatprep.subr.mxu0 0.0
    %v991 = vand.u32 %v572, 4294901760
    %992 = vmatpush1.msra.mxu0 %v991
    %993 = vmatprep.subr.mxu0 0.0
    %v994 = vand.u32 %v573, 4294901760
    %995 = vmatpush1.msra.mxu0 %v994
    %996 = vmatprep.subr.mxu0 0.0
    %v997 = vand.u32 %v574, 4294901760
    %998 = vmatpush1.msra.mxu0 %v997
    %999 = vmatprep.subr.mxu0 0.0
    %1000 = vmatpush1.msra.mxu0 0.0
    %1001 = vmatprep.subr.mxu0 0.0
    %1002 = vmatpush1.msra.mxu0 0.0
    %1003 = vmatprep.subr.mxu0 0.0
    %1004 = vmatpush1.msra.mxu0 0.0
    %1005 = vmatprep.subr.mxu0 0.0
    %1006 = vmatpush1.msra.mxu0 0.0
    %1007 = vmatprep.subr.mxu0 0.0
    %1008 = vmatpush1.msra.mxu0 0.0
    %1009 = vmatprep.subr.mxu0 0.0
    %1010 = vmatpush1.msra.mxu0 0.0
    %1011 = vmatprep.subr.mxu0 0.0
    %1012 = vmatpush1.msra.mxu0 0.0
    %1013 = vmatprep.subr.mxu0 0.0
    %1014 = vmatpush1.msra.mxu0 0.0
    %1015 = vmatprep.subr.mxu0 0.0
    %1016 = vmatpush1.msra.mxu0 0.0
    %1017 = vmatprep.subr.mxu0 0.0
    %1018 = vmatpush1.msra.mxu0 0.0
    %1019 = vmatprep.subr.mxu0 0.0
    %1020 = vmatpush1.msra.mxu0 0.0
    %1021 = vmatprep.subr.mxu0 0.0
    %1022 = vmatpush1.msra.mxu0 0.0
    %1023 = vmatprep.subr.mxu0 0.0
    %1024 = vmatpush1.msra.mxu0 0.0
    %1025 = vmatprep.subr.mxu0 0.0
    %1026 = vmatpush1.msra.mxu0 0.0
    %1027 = vmatprep.subr.mxu0 0.0
    %1028 = vmatpush1.msra.mxu0 0.0
    %1029 = vmatprep.subr.mxu0 0.0
    %1030 = vmatpush1.msra.mxu0 0.0
    %1031 = vmatprep.mubr.f32.mxu0 0.0
    %v1032 = vand.u32 %v550, 4294901760
    %v1033 = vsub.f32 %v550, %v1032
    %v1034 = vand.u32 %v1033, 4294901760
    %1035 = vmatmul.mubr.f32.gmra.mrb[0].mxu0 %v1034
    %v1036 = vpop.f32.mrb[0].mxu0
    %v1037 = vadd.f32 %v941, %v1036
    %v1038 = vpop.f32.mrb[0].mxu0
    %1039 = vmatprep.mubr.f32.mxu0 0.0
    %v1040 = vand.u32 %v556, 4294901760
    %v1041 = vsub.f32 %v556, %v1040
    %v1042 = vand.u32 %v1041, 4294901760
    %1043 = vmatmul.mubr.f32.gmra.mrb[0].mxu0 %v1042
    %v1044 = vpop.f32.mrb[0].mxu0
    %v1045 = vadd.f32 %v948, %v1044
    %v1046 = vpop.f32.mrb[0].mxu0
    %1047 = vdwg.mxu0
    %1048 = vmatprep.subr.mxu0 0.0
    %v1049 = vand.u32 %v559, 4294901760
    %v1050 = vsub.f32 %v559, %v1049
    %v1051 = vand.u32 %v1050, 4294901760
    %1052 = vmatpush1.msra.mxu0 %v1051
    %1053 = vmatprep.subr.mxu0 0.0
    %v1054 = vand.u32 %v560, 4294901760
    %v1055 = vsub.f32 %v560, %v1054
    %v1056 = vand.u32 %v1055, 4294901760
    %1057 = vmatpush1.msra.mxu0 %v1056
    %1058 = vmatprep.subr.mxu0 0.0
    %v1059 = vand.u32 %v561, 4294901760
    %v1060 = vsub.f32 %v561, %v1059
    %v1061 = vand.u32 %v1060, 4294901760
    %1062 = vmatpush1.msra.mxu0 %v1061
    %1063 = vmatprep.subr.mxu0 0.0
    %v1064 = vand.u32 %v562, 4294901760
    %v1065 = vsub.f32 %v562, %v1064
    %v1066 = vand.u32 %v1065, 4294901760
    %1067 = vmatpush1.msra.mxu0 %v1066
    %1068 = vmatprep.subr.mxu0 0.0
    %v1069 = vand.u32 %v563, 4294901760
    %v1070 = vsub.f32 %v563, %v1069
    %v1071 = vand.u32 %v1070, 4294901760
    %1072 = vmatpush1.msra.mxu0 %v1071
    %1073 = vmatprep.subr.mxu0 0.0
    %v1074 = vand.u32 %v564, 4294901760
    %v1075 = vsub.f32 %v564, %v1074
    %v1076 = vand.u32 %v1075, 4294901760
    %1077 = vmatpush1.msra.mxu0 %v1076
    %1078 = vmatprep.subr.mxu0 0.0
    %v1079 = vand.u32 %v565, 4294901760
    %v1080 = vsub.f32 %v565, %v1079
    %v1081 = vand.u32 %v1080, 4294901760
    %1082 = vmatpush1.msra.mxu0 %v1081
    %1083 = vmatprep.subr.mxu0 0.0
    %v1084 = vand.u32 %v566, 4294901760
    %v1085 = vsub.f32 %v566, %v1084
    %v1086 = vand.u32 %v1085, 4294901760
    %1087 = vmatpush1.msra.mxu0 %v1086
    %1088 = vmatprep.subr.mxu0 0.0
    %v1089 = vand.u32 %v567, 4294901760
    %v1090 = vsub.f32 %v567, %v1089
    %v1091 = vand.u32 %v1090, 4294901760
    %1092 = vmatpush1.msra.mxu0 %v1091
    %1093 = vmatprep.subr.mxu0 0.0
    %v1094 = vand.u32 %v568, 4294901760
    %v1095 = vsub.f32 %v568, %v1094
    %v1096 = vand.u32 %v1095, 4294901760
    %1097 = vmatpush1.msra.mxu0 %v1096
    %1098 = vmatprep.subr.mxu0 0.0
    %v1099 = vand.u32 %v569, 4294901760
    %v1100 = vsub.f32 %v569, %v1099
    %v1101 = vand.u32 %v1100, 4294901760
    %1102 = vmatpush1.msra.mxu0 %v1101
    %1103 = vmatprep.subr.mxu0 0.0
    %v1104 = vand.u32 %v570, 4294901760
    %v1105 = vsub.f32 %v570, %v1104
    %v1106 = vand.u32 %v1105, 4294901760
    %1107 = vmatpush1.msra.mxu0 %v1106
    %1108 = vmatprep.subr.mxu0 0.0
    %v1109 = vand.u32 %v571, 4294901760
    %v1110 = vsub.f32 %v571, %v1109
    %v1111 = vand.u32 %v1110, 4294901760
    %1112 = vmatpush1.msra.mxu0 %v1111
    %1113 = vmatprep.subr.mxu0 0.0
    %v1114 = vand.u32 %v572, 4294901760
    %v1115 = vsub.f32 %v572, %v1114
    %v1116 = vand.u32 %v1115, 4294901760
    %1117 = vmatpush1.msra.mxu0 %v1116
    %1118 = vmatprep.subr.mxu0 0.0
    %v1119 = vand.u32 %v573, 4294901760
    %v1120 = vsub.f32 %v573, %v1119
    %v1121 = vand.u32 %v1120, 4294901760
    %1122 = vmatpush1.msra.mxu0 %v1121
    %1123 = vmatprep.subr.mxu0 0.0
    %v1124 = vand.u32 %v574, 4294901760
    %v1125 = vsub.f32 %v574, %v1124
    %v1126 = vand.u32 %v1125, 4294901760
    %1127 = vmatpush1.msra.mxu0 %v1126
    %1128 = vmatprep.subr.mxu0 0.0
    %1129 = vmatpush1.msra.mxu0 0.0
    %1130 = vmatprep.subr.mxu0 0.0
    %1131 = vmatpush1.msra.mxu0 0.0
    %1132 = vmatprep.subr.mxu0 0.0
    %1133 = vmatpush1.msra.mxu0 0.0
    %1134 = vmatprep.subr.mxu0 0.0
    %1135 = vmatpush1.msra.mxu0 0.0
    %1136 = vmatprep.subr.mxu0 0.0
    %1137 = vmatpush1.msra.mxu0 0.0
    %1138 = vmatprep.subr.mxu0 0.0
    %1139 = vmatpush1.msra.mxu0 0.0
    %1140 = vmatprep.subr.mxu0 0.0
    %1141 = vmatpush1.msra.mxu0 0.0
    %1142 = vmatprep.subr.mxu0 0.0
    %1143 = vmatpush1.msra.mxu0 0.0
    %1144 = vmatprep.subr.mxu0 0.0
    %1145 = vmatpush1.msra.mxu0 0.0
    %1146 = vmatprep.subr.mxu0 0.0
    %1147 = vmatpush1.msra.mxu0 0.0
    %1148 = vmatprep.subr.mxu0 0.0
    %1149 = vmatpush1.msra.mxu0 0.0
    %1150 = vmatprep.subr.mxu0 0.0
    %1151 = vmatpush1.msra.mxu0 0.0
    %1152 = vmatprep.subr.mxu0 0.0
    %1153 = vmatpush1.msra.mxu0 0.0
    %1154 = vmatprep.subr.mxu0 0.0
    %1155 = vmatpush1.msra.mxu0 0.0
    %1156 = vmatprep.subr.mxu0 0.0
    %1157 = vmatpush1.msra.mxu0 0.0
    %1158 = vmatprep.subr.mxu0 0.0
    %1159 = vmatpush1.msra.mxu0 0.0
    %1160 = vmatprep.mubr.f32.mxu0 0.0
    %v1161 = vand.u32 %v550, 4294901760
    %1162 = vmatmul.mubr.f32.gmra.mrb[0].mxu0 %v1161
    %v1163 = vpop.f32.mrb[0].mxu0
    %v1164 = vadd.f32 %v1037, %v1163
    %v1165 = vpop.f32.mrb[0].mxu0
    %1166 = vmatprep.mubr.f32.mxu0 0.0
    %v1167 = vand.u32 %v556, 4294901760
    %1168 = vmatmul.mubr.f32.gmra.mrb[0].mxu0 %v1167
    %v1169 = vpop.f32.mrb[0].mxu0
    %v1170 = vadd.f32 %v1045, %v1169
    %v1171 = vpop.f32.mrb[0].mxu0
    %1172 = vdwg.mxu0
    %1173 = vmatprep.subr.mxu0 0.0
    %v1174 = vand.u32 %v559, 4294901760
    %1175 = vmatpush1.msra.mxu0 %v1174
    %1176 = vmatprep.subr.mxu0 0.0
    %v1177 = vand.u32 %v560, 4294901760
    %1178 = vmatpush1.msra.mxu0 %v1177
    %1179 = vmatprep.subr.mxu0 0.0
    %v1180 = vand.u32 %v561, 4294901760
    %1181 = vmatpush1.msra.mxu0 %v1180
    %1182 = vmatprep.subr.mxu0 0.0
    %v1183 = vand.u32 %v562, 4294901760
    %1184 = vmatpush1.msra.mxu0 %v1183
    %1185 = vmatprep.subr.mxu0 0.0
    %v1186 = vand.u32 %v563, 4294901760
    %1187 = vmatpush1.msra.mxu0 %v1186
    %1188 = vmatprep.subr.mxu0 0.0
    %v1189 = vand.u32 %v564, 4294901760
    %1190 = vmatpush1.msra.mxu0 %v1189
    %1191 = vmatprep.subr.mxu0 0.0
    %v1192 = vand.u32 %v565, 4294901760
    %1193 = vmatpush1.msra.mxu0 %v1192
    %1194 = vmatprep.subr.mxu0 0.0
    %v1195 = vand.u32 %v566, 4294901760
    %1196 = vmatpush1.msra.mxu0 %v1195
    %1197 = vmatprep.subr.mxu0 0.0
    %v1198 = vand.u32 %v567, 4294901760
    %1199 = vmatpush1.msra.mxu0 %v1198
    %1200 = vmatprep.subr.mxu0 0.0
    %v1201 = vand.u32 %v568, 4294901760
    %1202 = vmatpush1.msra.mxu0 %v1201
    %1203 = vmatprep.subr.mxu0 0.0
    %v1204 = vand.u32 %v569, 4294901760
    %1205 = vmatpush1.msra.mxu0 %v1204
    %1206 = vmatprep.subr.mxu0 0.0
    %v1207 = vand.u32 %v570, 4294901760
    %1208 = vmatpush1.msra.mxu0 %v1207
    %1209 = vmatprep.subr.mxu0 0.0
    %v1210 = vand.u32 %v571, 4294901760
    %1211 = vmatpush1.msra.mxu0 %v1210
    %1212 = vmatprep.subr.mxu0 0.0
    %v1213 = vand.u32 %v572, 4294901760
    %1214 = vmatpush1.msra.mxu0 %v1213
    %1215 = vmatprep.subr.mxu0 0.0
    %v1216 = vand.u32 %v573, 4294901760
    %1217 = vmatpush1.msra.mxu0 %v1216
    %1218 = vmatprep.subr.mxu0 0.0
    %v1219 = vand.u32 %v574, 4294901760
    %1220 = vmatpush1.msra.mxu0 %v1219
    %1221 = vmatprep.subr.mxu0 0.0
    %1222 = vmatpush1.msra.mxu0 0.0
    %1223 = vmatprep.subr.mxu0 0.0
    %1224 = vmatpush1.msra.mxu0 0.0
    %1225 = vmatprep.subr.mxu0 0.0
    %1226 = vmatpush1.msra.mxu0 0.0
    %1227 = vmatprep.subr.mxu0 0.0
    %1228 = vmatpush1.msra.mxu0 0.0
    %1229 = vmatprep.subr.mxu0 0.0
    %1230 = vmatpush1.msra.mxu0 0.0
    %1231 = vmatprep.subr.mxu0 0.0
    %1232 = vmatpush1.msra.mxu0 0.0
    %1233 = vmatprep.subr.mxu0 0.0
    %1234 = vmatpush1.msra.mxu0 0.0
    %1235 = vmatprep.subr.mxu0 0.0
    %1236 = vmatpush1.msra.mxu0 0.0
    %1237 = vmatprep.subr.mxu0 0.0
    %1238 = vmatpush1.msra.mxu0 0.0
    %1239 = vmatprep.subr.mxu0 0.0
    %1240 = vmatpush1.msra.mxu0 0.0
    %1241 = vmatprep.subr.mxu0 0.0
    %1242 = vmatpush1.msra.mxu0 0.0
    %1243 = vmatprep.subr.mxu0 0.0
    %1244 = vmatpush1.msra.mxu0 0.0
    %1245 = vmatprep.subr.mxu0 0.0
    %1246 = vmatpush1.msra.mxu0 0.0
    %1247 = vmatprep.subr.mxu0 0.0
    %1248 = vmatpush1.msra.mxu0 0.0
    %1249 = vmatprep.subr.mxu0 0.0
    %1250 = vmatpush1.msra.mxu0 0.0
    %1251 = vmatprep.subr.mxu0 0.0
    %1252 = vmatpush1.msra.mxu0 0.0
    %1253 = vmatprep.mubr.f32.mxu0 0.0
    %v1254 = vand.u32 %v550, 4294901760
    %1255 = vmatmul.mubr.f32.gmra.mrb[0].mxu0 %v1254
    %v1256 = vpop.f32.mrb[0].mxu0
    %v1257 = vadd.f32 %v1164, %v1256
    %v1258 = vpop.f32.mrb[0].mxu0
    %1259 = vmatprep.mubr.f32.mxu0 0.0
    %v1260 = vand.u32 %v556, 4294901760
    %1261 = vmatmul.mubr.f32.gmra.mrb[0].mxu0 %v1260
    %v1262 = vpop.f32.mrb[0].mxu0
    %v1263 = vadd.f32 %v1170, %v1262
    %v1264 = vpop.f32.mrb[0].mxu0
    %1265 = vdwg.mxu0
    %1266 = vst [vmem:[#allocation5] sm:$0xff] %v1257
    %1267 = vst [vmem:[#allocation5 + $0x8] sm:$0xff] %v1263
    // Predicated region
    $region22: #{tpu_custom_call.1} parent=1 // pred_check
      _
    $region23: #{tpu_custom_call.1} parent=1 // pred_check_branch
      %1269 = sbr.rel (0) target = $region25
    $region24: #{tpu_custom_call.1} parent=1 // pred_region
      %s1271 = ssub.s32 256, 256
      %1272 = vsyncadd [#allocation4], %s1271
      %s1273 = sshll.u32 [#allocation5], 4
      %s1274 = int_to_ptr.vmem [resolvable:$true] %s1273
      %1279 = dma.vmem_to_hbm [thread:$0]  %s1274, 256, %s4, [#allocation4], 128, 128, 8
    $region25: #{tpu_custom_call.1} parent=1 // pred_fallthru
      _
    // Predicated region
    $region26: #{tpu_custom_call.1} parent=1 // pred_check
      _
    $region27: #{tpu_custom_call.1} parent=1 // pred_check_branch
      %1281 = sbr.rel (0) target = $region29
    $region28: #{tpu_custom_call.1} parent=1 // pred_region
      %1282 = dma.done [#allocation4], 256
    $region29: #{tpu_custom_call.1} parent=1 // pred_fallthru
      _
    %1283 = vsyncpa [#allocation3], 1
    %1284 = vsyncpa [#allocation4], 1

</llo_original>
